<compile_context>
chip_gen: v6e
topology: v6e:2x2x1
jax: 0.10.0
libtpu: 0.0.40
codegen_flags: <defaults>
</compile_context>

<pallas_src>
import jax
import jax.numpy as jnp
from jax.experimental import pallas as pl
from jax.experimental.pallas import tpu as pltpu


def _round_up(x, m):
    return ((x + m - 1) // m) * m


def _cdiv(a, b):
    return (a + b - 1) // b


def _vmem_limit_bytes(G, tile_p, K):
    # double-buffered per-step slabs + in-kernel (G, tile_p) temporaries
    per_step = (6 + 4 + 3) * tile_p * 4 + G * (4 + K + 2) * 4
    temps = 10 * G * tile_p * 4
    est = 2 * per_step + temps + (8 << 20)
    return int(min(max(est, 32 << 20), 56 << 20))


# ----------------------------------------------------------------------------
# Pallas kernel 1: squared gt-center <-> prior-center distance
# (sqrt dropped: only consumed by per-level top-k, order preserving)
# ----------------------------------------------------------------------------
def _dist2_kernel(gt_ref, priors_ref, dist2_ref):
    gt = gt_ref[0]                                   # (G, 4)
    gcx = (gt[:, 0:1] + gt[:, 2:3]) * 0.5
    gcy = (gt[:, 1:2] + gt[:, 3:4]) * 0.5
    pcx = priors_ref[4:5, :]                         # (1, TP)
    pcy = priors_ref[5:6, :]
    dx = gcx - pcx
    dy = gcy - pcy
    dist2_ref[0] = dx * dx + dy * dy


def _dist2_call(gt_bboxes, priors_t, tile_p):
    B, G, _ = gt_bboxes.shape
    P_pad = priors_t.shape[1]
    n_tiles = P_pad // tile_p
    return pl.pallas_call(
        _dist2_kernel,
        out_shape=jax.ShapeDtypeStruct((B, G, P_pad), jnp.float32),
        grid_spec=pltpu.PrefetchScalarGridSpec(
            num_scalar_prefetch=0,
            grid=(n_tiles, B),                        # tile axis OUTER
            in_specs=[
                pl.BlockSpec((1, G, 4), lambda t, b: (b, 0, 0)),
                pl.BlockSpec((6, tile_p), lambda t, b: (0, t)),
            ],
            out_specs=pl.BlockSpec((1, G, tile_p), lambda t, b: (b, 0, t)),
        ),
        compiler_params=pltpu.CompilerParams(
            dimension_semantics=("parallel", "parallel"),
            vmem_limit_bytes=_vmem_limit_bytes(G, tile_p, 0)),
    )(gt_bboxes, priors_t)


# ----------------------------------------------------------------------------
# Pallas kernel 2: positive-mask resolution / reductions over the gt axis.
# Recomputes IoU(gt, cell prior), the in-gt mask and the yolov6 IoU(gt, pred)
# in-kernel, and rebuilds the candidate mask from the small index list —
# no (B, G, P) tensor is read from HBM.
# ----------------------------------------------------------------------------
def _select_kernel(gt_ref, priors_ref, pred_ref, cand_ref, thr_ref, pad_ref,
                   fg_ref, idx_ref, maxiou_ref):
    gt = gt_ref[0]                                   # (G, 4)
    gx1 = gt[:, 0:1]
    gy1 = gt[:, 1:2]
    gx2 = gt[:, 2:3]
    gy2 = gt[:, 3:4]
    gw = gx2 - gx1
    gh = gy2 - gy1
    area_g = gw * gh                                 # (G, 1)

    px1 = priors_ref[0:1, :]                         # (1, TP) cell prior box
    py1 = priors_ref[1:2, :]
    px2 = priors_ref[2:3, :]
    py2 = priors_ref[3:4, :]
    pcx = priors_ref[4:5, :]                         # prior centers
    pcy = priors_ref[5:6, :]

    # --- IoU(gt, 2.5*stride cell priors), mmdet semantics (eps = 1e-6) ---
    area_p = (px2 - px1) * (py2 - py1)
    iw = jnp.maximum(jnp.minimum(gx2, px2) - jnp.maximum(gx1, px1), 0.0)
    ih = jnp.maximum(jnp.minimum(gy2, py2) - jnp.maximum(gy1, py1), 0.0)
    inter = iw * ih
    ov = inter / jnp.maximum(area_g + area_p - inter, 1e-6)   # (G, TP)

    # --- prior center strictly inside gt (eps = 1e-9) ---
    d = jnp.minimum(jnp.minimum(pcx - gx1, pcy - gy1),
                    jnp.minimum(gx2 - pcx, gy2 - pcy))
    in_gts = (d > 1e-9).astype(jnp.float32)          # (G, TP)

    # --- rebuild candidate mask from the small (G, K) index list ---
    Gk, TP = ov.shape
    K = cand_ref.shape[2]
    lane = (jax.lax.broadcasted_iota(jnp.int32, (1, TP), 1)
            + pl.program_id(0) * TP)                 # global prior index
    cand = cand_ref[0]                               # (G, K) int32
    counts = jnp.zeros_like(ov)
    for j in range(K):                               # K is small (levels*topk)
        counts = counts + (cand[:, j:j + 1] == lane).astype(jnp.float32)
    pad = pad_ref[0]                                 # (G, 1) pad flag
    in_cand = counts * pad                           # padded gts -> 0

    thr = thr_ref[0]                                 # (G, 1)
    cand_ov = jnp.where(in_cand > 0, ov, 0.0)
    is_pos = jnp.where(cand_ov > thr, in_cand, jnp.zeros_like(in_cand))
    pos_mask = is_pos * in_gts * pad                 # (G, TP)

    fg0 = jnp.sum(pos_mask, axis=0, keepdims=True)   # (1, TP)

    gidx = jax.lax.broadcasted_iota(jnp.float32, ov.shape, 0)

    # priors matched to >1 gt keep only the highest-overlap gt (first occ.)
    max_ov = jnp.max(ov, axis=0, keepdims=True)
    first_max = jnp.min(jnp.where(ov == max_ov, gidx, float(Gk)),
                        axis=0, keepdims=True)
    is_max = (gidx == first_max).astype(jnp.float32)
    pos_mask = jnp.where(fg0 > 1.0, is_max, pos_mask)
    fg = jnp.sum(pos_mask, axis=0, keepdims=True)    # (1, TP)

    # assigned gt index = first-occurrence argmax of pos_mask along gt axis
    pm_max = jnp.max(pos_mask, axis=0, keepdims=True)
    a_idx = jnp.min(jnp.where(pos_mask == pm_max, gidx, float(Gk)),
                    axis=0, keepdims=True)           # (1, TP)

    # --- yolov6 IoU(gt, pred bboxes) (eps = 1e-9) ---
    pred = pred_ref[0]                               # (4, TP)
    bx1 = pred[0:1, :]
    by1 = pred[1:2, :]
    bx2 = pred[2:3, :]
    by2 = pred[3:4, :]
    ow = jnp.maximum(jnp.minimum(gx2, bx2) - jnp.maximum(gx1, bx1), 0.0)
    oh = jnp.maximum(jnp.minimum(gy2, by2) - jnp.maximum(gy1, by1), 0.0)
    o = ow * oh
    a1 = jnp.maximum(gw, 0.0) * jnp.maximum(gh, 0.0)
    a2 = jnp.maximum(bx2 - bx1, 0.0) * jnp.maximum(by2 - by1, 0.0)
    piou = o / (a1 + a2 - o + 1e-9)

    fg_ref[0] = fg
    idx_ref[0] = a_idx.astype(jnp.int32)
    maxiou_ref[0] = jnp.max(piou * pos_mask, axis=0, keepdims=True)


def _select_call(gt_bboxes, priors_t, pred_t, cand_idx, thr, pad_f, tile_p):
    B, G, _ = gt_bboxes.shape
    P_pad = priors_t.shape[1]
    n_tiles = P_pad // tile_p
    K = cand_idx.shape[-1]
    sd_f = jax.ShapeDtypeStruct((B, 1, P_pad), jnp.float32)
    sd_i = jax.ShapeDtypeStruct((B, 1, P_pad), jnp.int32)
    out_spec = pl.BlockSpec((1, 1, tile_p), lambda t, b: (b, 0, t))
    return pl.pallas_call(
        _select_kernel,
        out_shape=(sd_f, sd_i, sd_f),
        grid_spec=pltpu.PrefetchScalarGridSpec(
            num_scalar_prefetch=0,
            grid=(n_tiles, B),                        # tile axis OUTER
            in_specs=[
                pl.BlockSpec((1, G, 4), lambda t, b: (b, 0, 0)),
                pl.BlockSpec((6, tile_p), lambda t, b: (0, t)),
                pl.BlockSpec((1, 4, tile_p), lambda t, b: (b, 0, t)),
                pl.BlockSpec((1, G, K), lambda t, b: (b, 0, 0)),
                pl.BlockSpec((1, G, 1), lambda t, b: (b, 0, 0)),
                pl.BlockSpec((1, G, 1), lambda t, b: (b, 0, 0)),
            ],
            out_specs=[out_spec, out_spec, out_spec],
        ),
        compiler_params=pltpu.CompilerParams(
            dimension_semantics=("parallel", "parallel"),
            vmem_limit_bytes=_vmem_limit_bytes(G, tile_p, K)),
    )(gt_bboxes, priors_t, pred_t, cand_idx, thr, pad_f)


# ----------------------------------------------------------------------------
# Full BatchATSSAssigner forward
# ----------------------------------------------------------------------------
def batch_atss_assign(pred_bboxes, priors, num_level_priors, gt_labels,
                      gt_bboxes, pad_bbox_flag, *, num_classes, topk=9):
    B, G, _ = gt_bboxes.shape
    P = priors.shape[0]

    if G == 0:
        return {
            "assigned_labels": jnp.full((B, P), num_classes, jnp.int32),
            "assigned_bboxes": jnp.zeros((B, P, 4), jnp.float32),
            "assigned_scores": jnp.zeros((B, P, num_classes), jnp.float32),
            "fg_mask_pre_prior": jnp.zeros((B, P), bool),
        }

    # ----- lane-dense padding of the prior axis, even tiles capped at 2048 -----
    p128 = _round_up(P, 128)
    n_tiles = _cdiv(p128, 2048)
    if n_tiles == 1 and B < 2 and p128 >= 256:
        n_tiles = 2                       # keep both v7x TensorCores busy
    tile_p = _round_up(_cdiv(p128, n_tiles), 128)
    P_pad = tile_p * n_tiles
    pad_amt = P_pad - P

    priors = priors.astype(jnp.float32)
    half_w = priors[:, 2] * 2.5
    half_h = priors[:, 3] * 2.5
    cell_x1 = priors[:, 0] - half_w
    cell_y1 = priors[:, 1] - half_h
    cell_x2 = priors[:, 0] + half_w
    cell_y2 = priors[:, 1] + half_h
    priors_t = jnp.stack([cell_x1, cell_y1, cell_x2, cell_y2,
                          priors[:, 0], priors[:, 1]], axis=0)          # (6, P)
    priors_cell = jnp.stack([cell_x1, cell_y1, cell_x2, cell_y2], -1)   # (P, 4)
    pred_t = jnp.transpose(pred_bboxes, (0, 2, 1)).astype(jnp.float32)  # (B,4,P)
    if pad_amt:
        priors_t = jnp.pad(priors_t, ((0, 0), (0, pad_amt)))
        pred_t = jnp.pad(pred_t, ((0, 0), (0, 0), (0, pad_amt)))

    gt_f = gt_bboxes.astype(jnp.float32)
    pad_f = pad_bbox_flag.astype(jnp.float32)                           # (B,G,1)

    # ----- kernel 1: squared center distances -----
    dist2 = _dist2_call(gt_f, priors_t, tile_p)                         # (B,G,P_pad)

    # ----- per-level top-k candidate selection (glue; data-dependent) -----
    cand_list = []
    start = 0
    for npl in num_level_priors:
        k = min(topk, npl)
        _, idx = jax.lax.top_k(-dist2[..., start:start + npl], k)
        cand_list.append(idx + start)
        start += npl
    candidate_idxs = jnp.concatenate(cand_list, axis=-1).astype(jnp.int32)  # (B,G,K)

    # ----- iou threshold = mean + unbiased std of candidate IoUs -----
    # computed directly on the tiny gathered candidate cell-prior boxes
    cb = jnp.take(priors_cell, candidate_idxs, axis=0)                  # (B,G,K,4)
    gx1 = gt_f[..., 0:1]
    gy1 = gt_f[..., 1:2]
    gx2 = gt_f[..., 2:3]
    gy2 = gt_f[..., 3:4]
    area_g = (gx2 - gx1) * (gy2 - gy1)                                  # (B,G,1)
    iw = jnp.maximum(jnp.minimum(gx2, cb[..., 2]) - jnp.maximum(gx1, cb[..., 0]), 0.0)
    ih = jnp.maximum(jnp.minimum(gy2, cb[..., 3]) - jnp.maximum(gy1, cb[..., 1]), 0.0)
    inter = iw * ih
    area_p = (cb[..., 2] - cb[..., 0]) * (cb[..., 3] - cb[..., 1])
    cand_ov = inter / jnp.maximum(area_g + area_p - inter, 1e-6)        # (B,G,K)
    cand_ov = cand_ov * pad_f                   # padded gts contribute zeros
    thr = (cand_ov.mean(axis=-1, keepdims=True)
           + jnp.std(cand_ov, axis=-1, ddof=1, keepdims=True))          # (B,G,1)

    # ----- kernel 2: positive-mask resolution / reductions over gt axis -----
    fg3, idx3, maxiou3 = _select_call(gt_f, priors_t, pred_t,
                                      candidate_idxs, thr, pad_f, tile_p)
    fg_mask = fg3[:, 0, :P]                                             # (B, P)
    assigned_gt_idx = idx3[:, 0, :P]                                    # (B, P)
    max_iou = maxiou3[:, 0, :P]                                         # (B, P)

    # ----- get_targets (small gathers / one-hot) -----
    flat_idx = assigned_gt_idx + jnp.arange(B, dtype=jnp.int32)[:, None] * G
    gt_labels_flat = gt_labels.reshape(-1).astype(jnp.int32)
    assigned_labels = gt_labels_flat[flat_idx.reshape(-1)].reshape(B, P)
    assigned_labels = jnp.where(fg_mask > 0, assigned_labels, num_classes)
    assigned_bboxes = gt_f.reshape(-1, 4)[flat_idx.reshape(-1)].reshape(B, P, 4)
    assigned_scores = jax.nn.one_hot(assigned_labels, num_classes + 1,
                                     dtype=jnp.float32)[..., :num_classes]
    assigned_scores = assigned_scores * max_iou[..., None]

    return {
        "assigned_labels": assigned_labels.astype(jnp.int32),
        "assigned_bboxes": assigned_bboxes.astype(jnp.float32),
        "assigned_scores": assigned_scores,
        "fg_mask_pre_prior": fg_mask > 0,
    }


# ----------------------------------------------------------------------------
# Demo
# ----------------------------------------------------------------------------
if __name__ == "__main__":
    key = jax.random.PRNGKey(0)
    B, G, num_classes, topk = 2, 8, 8, 9

    # priors: (cx, cy, stride, stride) for strides 8/16/32 on a 128x128 image
    feat = [(16, 16, 8), (8, 8, 16), (4, 4, 32)]
    priors_list, num_level_priors = [], []
    for (h, w, s) in feat:
        yy, xx = jnp.meshgrid(jnp.arange(h), jnp.arange(w), indexing="ij")
        cx = (xx.reshape(-1).astype(jnp.float32) + 0.5) * s
        cy = (yy.reshape(-1).astype(jnp.float32) + 0.5) * s
        st = jnp.full_like(cx, float(s))
        priors_list.append(jnp.stack([cx, cy, st, st], axis=-1))
        num_level_priors.append(h * w)
    priors = jnp.concatenate(priors_list, axis=0)                       # (336, 4)
    P = priors.shape[0]

    k1, k2, k3, k4 = jax.random.split(key, 4)
    cxy = jax.random.uniform(k1, (B, G, 2), minval=16.0, maxval=112.0)
    wh = jax.random.uniform(k2, (B, G, 2), minval=8.0, maxval=48.0)
    gt_bboxes = jnp.concatenate([cxy - wh / 2, cxy + wh / 2], axis=-1)
    gt_labels = jax.random.randint(k3, (B, G, 1), 0, num_classes)
    pad_bbox_flag = jnp.concatenate(
        [jnp.ones((B, 5, 1), jnp.float32), jnp.zeros((B, 3, 1), jnp.float32)], axis=1)
    gt_bboxes = gt_bboxes * pad_bbox_flag
    gt_labels = (gt_labels.astype(jnp.float32) * pad_bbox_flag).astype(jnp.int32)

    centers = priors[None, :, :2]
    strides = priors[None, :, 2:4]
    jitter = jax.random.uniform(k4, (B, P, 4), minval=-4.0, maxval=4.0)
    pred_bboxes = jnp.concatenate(
        [centers - 2.0 * strides, centers + 2.0 * strides], axis=-1) + jitter

    result = batch_atss_assign(pred_bboxes, priors, num_level_priors,
                               gt_labels, gt_bboxes, pad_bbox_flag,
                               num_classes=num_classes, topk=topk)
    result = jax.tree_util.tree_map(jax.block_until_ready, result)

    assert result["assigned_labels"].shape == (B, P)
    assert result["assigned_bboxes"].shape == (B, P, 4)
    assert result["assigned_scores"].shape == (B, P, num_classes)
    assert result["fg_mask_pre_prior"].shape == (B, P)
    assert bool(jnp.all(jnp.isfinite(result["assigned_scores"])))
    print("KERNEL_OK")
</pallas_src>

<mosaic_0001>
module attributes {stable_mosaic.version = 11 : i64} {
  func.func @_dist2_kernel(%arg0: i32, %arg1: i32, %arg2: memref<1x8x4xf32, #tpu.memory_space<vmem>>, %arg3: memref<6x384xf32, #tpu.memory_space<vmem>>, %arg4: memref<1x8x384xf32, #tpu.memory_space<vmem>>) attributes {dimension_semantics = [#tpu.dimension_semantics<parallel>, #tpu.dimension_semantics<parallel>], iteration_bounds = array<i64: 1, 2>, scalar_prefetch = 0 : i64, scratch_operands = 0 : i64, tpu.core_type = #tpu.core_type<tc>, window_params = [{transform_indices = @transform_0, window_bounds = array<i64: 1, 8, 4>}, {transform_indices = @transform_1, window_bounds = array<i64: 6, 384>}, {transform_indices = @transform_2, window_bounds = array<i64: 1, 8, 384>}]} {
    %c0 = arith.constant 0 : index
    %c0_0 = arith.constant 0 : index
    %c0_1 = arith.constant 0 : index
    %0 = vector.load %arg2[%c0, %c0_0, %c0_1] : memref<1x8x4xf32, #tpu.memory_space<vmem>>, vector<1x8x4xf32>
    %1 = vector.shape_cast %0 : vector<1x8x4xf32> to vector<8x4xf32>
    %2 = vector.extract_strided_slice %1 {offsets = [0, 0], sizes = [8, 1], strides = [1, 1]} : vector<8x4xf32> to vector<8x1xf32>
    %3 = vector.extract_strided_slice %1 {offsets = [0, 2], sizes = [8, 1], strides = [1, 1]} : vector<8x4xf32> to vector<8x1xf32>
    %4 = arith.addf %2, %3 : vector<8x1xf32>
    %cst = arith.constant 5.000000e-01 : f32
    %5 = vector.broadcast %cst : f32 to vector<8x1xf32>
    %6 = arith.mulf %4, %5 : vector<8x1xf32>
    %7 = vector.extract_strided_slice %1 {offsets = [0, 1], sizes = [8, 1], strides = [1, 1]} : vector<8x4xf32> to vector<8x1xf32>
    %8 = vector.extract_strided_slice %1 {offsets = [0, 3], sizes = [8, 1], strides = [1, 1]} : vector<8x4xf32> to vector<8x1xf32>
    %9 = arith.addf %7, %8 : vector<8x1xf32>
    %cst_2 = arith.constant 5.000000e-01 : f32
    %10 = vector.broadcast %cst_2 : f32 to vector<8x1xf32>
    %11 = arith.mulf %9, %10 : vector<8x1xf32>
    %c4 = arith.constant 4 : index
    %c0_3 = arith.constant 0 : index
    %12 = vector.load %arg3[%c4, %c0_3] : memref<6x384xf32, #tpu.memory_space<vmem>>, vector<1x384xf32>
    %c5 = arith.constant 5 : index
    %c0_4 = arith.constant 0 : index
    %13 = vector.load %arg3[%c5, %c0_4] : memref<6x384xf32, #tpu.memory_space<vmem>>, vector<1x384xf32>
    %14 = vector.broadcast %6 : vector<8x1xf32> to vector<8x384xf32>
    %15 = vector.broadcast %12 : vector<1x384xf32> to vector<8x384xf32>
    %16 = arith.subf %14, %15 : vector<8x384xf32>
    %17 = vector.broadcast %11 : vector<8x1xf32> to vector<8x384xf32>
    %18 = vector.broadcast %13 : vector<1x384xf32> to vector<8x384xf32>
    %19 = arith.subf %17, %18 : vector<8x384xf32>
    %20 = arith.mulf %16, %16 : vector<8x384xf32>
    %21 = arith.mulf %19, %19 : vector<8x384xf32>
    %22 = arith.addf %20, %21 : vector<8x384xf32>
    %c0_5 = arith.constant 0 : index
    %c0_6 = arith.constant 0 : index
    %c0_7 = arith.constant 0 : index
    %23 = vector.load %arg4[%c0_5, %c0_6, %c0_7] : memref<1x8x384xf32, #tpu.memory_space<vmem>>, vector<1x8x384xf32>
    %24 = vector.shape_cast %23 : vector<1x8x384xf32> to vector<8x384xf32>
    %25 = vector.shape_cast %22 : vector<8x384xf32> to vector<1x8x384xf32>
    tpu.vector_store %arg4[%c0_5, %c0_6, %c0_7], %25 {strides = array<i32>} : memref<1x8x384xf32, #tpu.memory_space<vmem>>, vector<1x8x384xf32>,
    return
  }
  func.func @transform_0(%arg0: i32, %arg1: i32) -> (i32, i32, i32) {
    %c0_i32 = arith.constant 0 : i32
    %c0_i32_0 = arith.constant 0 : i32
    %c0_i32_1 = arith.constant 0 : i32
    return %arg1, %c0_i32, %c0_i32_0 : i32, i32, i32
  }
  func.func @transform_1(%arg0: i32, %arg1: i32) -> (i32, i32) {
    %c0_i32 = arith.constant 0 : i32
    %c0_i32_0 = arith.constant 0 : i32
    return %c0_i32, %arg0 : i32, i32
  }
  func.func @transform_2(%arg0: i32, %arg1: i32) -> (i32, i32, i32) {
    %c0_i32 = arith.constant 0 : i32
    %c0_i32_0 = arith.constant 0 : i32
    return %arg1, %c0_i32, %arg0 : i32, i32, i32
  }
}

</mosaic_0001>

<llo_original>
// kernel: tpu_custom_call.1
$region0: #{tpu_custom_call.1}
  #allocation0 [shape = 'u32[]', space=smem, size = 0x4, offset = 0x4, fixed_abs, tag = 'smem constant byte address 0x4 - core index']
  #allocation1 [shape = 'u32[144,128]{1,0:T(1,128)}', space=vmem, size = 0x12000, scoped, tag = 'internal scratch']
  %s0 = inlined_call_operand.vmem [shape: f32[2,8,4], index: 0, kind: input, shape index: {}]
  %s1 = inlined_call_operand.vmem [shape: f32[6,384], index: 1, kind: input, shape index: {}]
  %s2 = inlined_call_operand.hbm [shape: f32[2,8,384], index: 2, kind: output, shape index: {}]
  %s3 = sld [smem:[#allocation0]]
  $region41: #{tpu_custom_call.1} parent=0
    _
  %s5 = ssub.s32 1, %s3
  %s6 = scalar_select 0, %s5, %s3
  $region1: #{tpu_custom_call.1} parent=0
    #allocation2 [shape = 'u8[24576]{0}', space=vmem, size = 0x6000, scoped, tag = 'output window, operand 0']
    #allocation3 [shape = 's32[2]{0}', space=sflag, size = 0x8, scoped, tag = 'scoped memory for tpu_custom_call.1']
    %7 = vsyncpa [#allocation3], 0
    %s8 = scalar_lea.sflag [#allocation3], 1
    %9 = vsyncpa %s8, 0
    loop: start=0, step=1, limit=4
    $region2: #{tpu_custom_call.1} parent=1 // loop_pre_header
      _
    $region3: #{tpu_custom_call.1} parent=1 // loop_header
      %s11 = sphi 0, %s15
      %p12 = scmp.ge.s32.totalorder %s11, 4
      %s18 = sphi 0, %s30
      %s19 = sphi 0, %s26
      %s20 = sphi 0, %s18
      %s21 = sphi 0, %s19
      %s22 = sphi 0, %s20
      %s23 = sphi 0, %s21
      %s33 = sphi 0, %s35
      %s36 = sphi 0, %s33
      %s37 = sphi 0, %s36
      %s53 = sphi 0, %s37
      %s59 = sphi 0, %s61
      %s62 = sphi 0, %s59
      %s63 = sphi 0, %s62
      %s79 = sphi 0, %s63
      %s87 = sphi 0, %s89
      %s90 = sphi 0, %s87
      %s91 = sphi 0, %s90
      %s107 = sphi 0, %s91
    $region4: #{tpu_custom_call.1} parent=1 // loop_header_branch
      %14 = sbr.rel (%p12) target = $region8
    $region5: #{tpu_custom_call.1} parent=1 // loop_body
      %s16 = ssub.s32 %s11, 1
      %s17 = ssub.s32 %s11, 2
      %s24 = sadd.s32 1, %s19
      %p25 = scmp.ge.s32.totalorder %s24, 2
      %s26 = scalar_select %p25, 0, %s24
      %s27 = sadd.s32 1, %s18
      %s28 = scalar_select %p25, %s27, %s18
      %p29 = scmp.ge.s32.totalorder %s28, 1
      %s30 = scalar_select %p29, 0, %s28
      %s31 = ssub.s32 %s19, %s26
      %p32 = scmp.eq.s32.totalorder %s31, 0
      %s34 = sadd.s32 %s33, 1
      %s35 = scalar_select %p32, %s33, %s34
      %p38 = pneg %p32
      %p39 = scmp.eq.s32.totalorder %s11, 1
      %p40 = por %p38, %p39
      %p41 = scmp.ne.s32.totalorder %s33, %s36
      %p42 = scmp.eq.s32.totalorder %s11, 0
      %p43 = por %p41, %p42
      %p44 = scmp.ne.s32.totalorder %s33, %s36
      %p45 = scmp.eq.s32.totalorder %s16, 1
      %p46 = por %p44, %p45
      %p47 = scmp.ne.s32.totalorder %s36, %s37
      %p48 = scmp.eq.s32.totalorder %s16, 0
      %p49 = por %p47, %p48
      %p50 = scmp.ne.s32.totalorder %s36, %s37
      %p51 = scmp.eq.s32.totalorder %s17, 1
      %p52 = por %p50, %p51
      %p54 = scmp.ne.s32.totalorder %s37, %s53
      %p55 = scmp.eq.s32.totalorder %s17, 0
      %p56 = por %p54, %p55
      %s57 = ssub.s32 %s18, %s30
      %p58 = scmp.eq.s32.totalorder %s57, 0
      %s60 = sadd.s32 %s59, 1
      %s61 = scalar_select %p58, %s59, %s60
      %p64 = pneg %p58
      %p65 = scmp.eq.s32.totalorder %s11, 1
      %p66 = por %p64, %p65
      %p67 = scmp.ne.s32.totalorder %s59, %s62
      %p68 = scmp.eq.s32.totalorder %s11, 0
      %p69 = por %p67, %p68
      %p70 = scmp.ne.s32.totalorder %s59, %s62
      %p71 = scmp.eq.s32.totalorder %s16, 1
      %p72 = por %p70, %p71
      %p73 = scmp.ne.s32.totalorder %s62, %s63
      %p74 = scmp.eq.s32.totalorder %s16, 0
      %p75 = por %p73, %p74
      %p76 = scmp.ne.s32.totalorder %s62, %s63
      %p77 = scmp.eq.s32.totalorder %s17, 1
      %p78 = por %p76, %p77
      %p80 = scmp.ne.s32.totalorder %s63, %s79
      %p81 = scmp.eq.s32.totalorder %s17, 0
      %p82 = por %p80, %p81
      %s83 = ssub.s32 %s19, %s26
      %s84 = ssub.s32 %s18, %s30
      %s85 = sor.u32 %s83, %s84
      %p86 = scmp.eq.s32.totalorder %s85, 0
      %s88 = sadd.s32 %s87, 1
      %s89 = scalar_select %p86, %s87, %s88
      %p92 = pneg %p86
      %p93 = scmp.eq.s32.totalorder %s11, 1
      %p94 = por %p92, %p93
      %p95 = scmp.ne.s32.totalorder %s87, %s90
      %p96 = scmp.eq.s32.totalorder %s11, 0
      %p97 = por %p95, %p96
      %p98 = scmp.ne.s32.totalorder %s87, %s90
      %p99 = scmp.eq.s32.totalorder %s16, 1
      %p100 = por %p98, %p99
      %p101 = scmp.ne.s32.totalorder %s90, %s91
      %p102 = scmp.eq.s32.totalorder %s16, 0
      %p103 = por %p101, %p102
      %p104 = scmp.ne.s32.totalorder %s90, %s91
      %p105 = scmp.eq.s32.totalorder %s17, 1
      %p106 = por %p104, %p105
      %p108 = scmp.ne.s32.totalorder %s91, %s107
      %p109 = scmp.eq.s32.totalorder %s17, 0
      %p110 = por %p108, %p109
      %p111 = scmp.le.s32.totalorder 1, %s11
      %p112 = scmp.lt.s32.totalorder %s11, 3
      %p113 = pnand %p111, %p112
      %p114 = pneg %p113
      // Predicated region
      $region9: #{tpu_custom_call.1} parent=5 // pred_check
        _
      $region10: #{tpu_custom_call.1} parent=5 // pred_check_branch
        %116 = sbr.rel (%p113) target = $region12
      $region11: #{tpu_custom_call.1} parent=5 // pred_region
        %s117 = ssub.s32 %s11, 1
        // Predicated region
        $region13: #{tpu_custom_call.1} parent=11 // pred_check
          %p118 = pneg %p75
        $region14: #{tpu_custom_call.1} parent=11 // pred_check_branch
          %120 = sbr.rel (%p118) target = $region16
        $region15: #{tpu_custom_call.1} parent=11 // pred_region
          %s121 = smul.u32 3, %s20
          %p122 = scmp.lt.s32.totalorder %s121, 2
          %s123 = scalar_select %p122, %s121, 2
          %s124 = smul.addr %s123, 8
          %s125 = scalar_lea.vmem %s1, %s124
          %s126 = smul.u32 3, %s20
        $region16: #{tpu_custom_call.1} parent=11 // pred_fallthru
          _
      $region12: #{tpu_custom_call.1} parent=5 // pred_fallthru
        _
      %p127 = scmp.lt.s32.totalorder %s11, 2
      // Predicated region
      $region17: #{tpu_custom_call.1} parent=5 // pred_check
        %p128 = pneg %p127
      $region18: #{tpu_custom_call.1} parent=5 // pred_check_branch
        %130 = sbr.rel (%p128) target = $region20
      $region19: #{tpu_custom_call.1} parent=5 // pred_region
        // Predicated region
        $region21: #{tpu_custom_call.1} parent=19 // pred_check
          %p131 = pneg %p43
        $region22: #{tpu_custom_call.1} parent=19 // pred_check_branch
          %133 = sbr.rel (%p131) target = $region24
        $region23: #{tpu_custom_call.1} parent=19 // pred_region
          %p134 = scmp.lt.s32.totalorder %s19, 1
          %s135 = scalar_select %p134, %s19, 1
          %s136 = smul.addr %s135, 8
          %s137 = scalar_lea.vmem %s0, %s136
        $region24: #{tpu_custom_call.1} parent=19 // pred_fallthru
          _
      $region20: #{tpu_custom_call.1} parent=5 // pred_fallthru
        _
      %p138 = scmp.le.s32.totalorder 1, %s11
      %p139 = scmp.lt.s32.totalorder %s11, 3
      %p140 = pnand %p138, %p139
      %p141 = pneg %p140
      // Predicated region
      $region25: #{tpu_custom_call.1} parent=5 // pred_check
        _
      $region26: #{tpu_custom_call.1} parent=5 // pred_check_branch
        %143 = sbr.rel (%p140) target = $region28
      $region27: #{tpu_custom_call.1} parent=5 // pred_region
        %s144 = ssub.s32 %s11, 1
        %p145 = scmp.lt.s32.totalorder %s21, 1
        %s146 = scalar_select %p145, %s21, 1
        %s147 = smul.addr %s146, 8
        %s148 = scalar_lea.vmem %s0, %s147
        %p149 = pneg %p49
        %p150 = pneg %p46
        %s151 = smul.u32 3, %s20
        %p152 = scmp.lt.s32.totalorder %s151, 2
        %s153 = scalar_select %p152, %s151, 2
        %s154 = smul.addr %s153, 8
        %s155 = scalar_lea.vmem %s1, %s154
        %p156 = pneg %p75
        %p157 = pneg %p72
        %p158 = pneg %p103
        %p159 = pneg %p100
        %s160 = sand.u32 %s90, 1
        %s161 = scalar_lea.sflag [#allocation3], %s160
        %s162 = sand.u32 %s90, 1
        %s163 = smul.addr %s162, 24
        %s164 = scalar_lea.vmem [#allocation2], %s163
        %p165 = scmp.lt.s32.totalorder %s21, 1
        %s166 = scalar_select %p165, %s21, 1
        %s167 = smul.addr %s166, 8
        %s168 = scalar_lea.vmem %s0, %s167
        %s169 = smul.u32 3, %s20
        %p170 = scmp.lt.s32.totalorder %s169, 2
        %s171 = scalar_select %p170, %s169, 2
        %s172 = smul.addr %s171, 8
        %s173 = scalar_lea.vmem %s1, %s172
        %s174 = smul.u32 3, %s20
        %s175 = smul.u32 3, %s20
        %v176 = vld [vmem:[%s168] sm:$0xff]
        %178 = vrot.lane.b32.xlu0 %v176, 126
        %v179 = vpop.permute.xlu0 %178
        %v181 = vadd.f32 %v176, %v179
        %v182 = vmul.f32 %v181, 0.5
        %s183 = scalar_lea.vmem %s173, 4
        %v184 = vld [vmem:[%s183] ss:$8 sm:$0x7]
        %s185 = scalar_lea.vmem %s173, 5
        %v186 = vld [vmem:[%s185] ss:$8 sm:$0x7]
        %188 = vset.pattern.permute.xlu0 0
        %189 = vperm.xlu0 %188, %v182
        %v190 = vpop.permute.xlu0 %189
        %v193 = vlaneseq
        %v194 = vshrl.u32 %v193, 7
        %v195 = vsub.s32 0, %v194
        %v196 = vrot.slane %v184, %v195
        %v197 = vlaneseq
        %v198 = vshrl.u32 %v197, 7
        %v199 = vsub.s32 1, %v198
        %v200 = vrot.slane %v184, %v199
        %v201 = vlaneseq
        %v202 = vshrl.u32 %v201, 7
        %v203 = vsub.s32 2, %v202
        %v204 = vrot.slane %v184, %v203
        %v208 = vsub.f32 %v190, %v196
        %v209 = vsub.f32 %v190, %v200
        %v210 = vsub.f32 %v190, %v204
        %211 = vset.pattern.permute.xlu0 1
        %212 = vperm.xlu0 %211, %v182
        %v213 = vpop.permute.xlu0 %212
        %v216 = vlaneseq
        %v217 = vshrl.u32 %v216, 7
        %v218 = vsub.s32 0, %v217
        %v219 = vrot.slane %v186, %v218
        %v220 = vlaneseq
        %v221 = vshrl.u32 %v220, 7
        %v222 = vsub.s32 1, %v221
        %v223 = vrot.slane %v186, %v222
        %v224 = vlaneseq
        %v225 = vshrl.u32 %v224, 7
        %v226 = vsub.s32 2, %v225
        %v227 = vrot.slane %v186, %v226
        %v231 = vsub.f32 %v213, %v219
        %v232 = vsub.f32 %v213, %v223
        %v233 = vsub.f32 %v213, %v227
        %v234 = vmul.f32 %v208, %v208
        %v235 = vmul.f32 %v209, %v209
        %v236 = vmul.f32 %v210, %v210
        %v237 = vmul.f32 %v231, %v231
        %v238 = vmul.f32 %v232, %v232
        %v239 = vmul.f32 %v233, %v233
        %v240 = vadd.f32 %v234, %v237
        %v241 = vadd.f32 %v235, %v238
        %v242 = vadd.f32 %v236, %v239
        %243 = vst [vmem:[%s164] sm:$0xff] %v240
        %244 = vst [vmem:[%s164 + $0x8] sm:$0xff] %v241
        %245 = vst [vmem:[%s164 + $0x10] sm:$0xff] %v242
        %s246 = sand.u32 %s90, 1
        %s247 = scalar_lea.sflag [#allocation3], %s246
        %s248 = sand.u32 %s90, 1
        %s249 = smul.addr %s248, 24
        %s250 = scalar_lea.vmem [#allocation2], %s249
        // Predicated region
        $region29: #{tpu_custom_call.1} parent=27 // pred_check
          %p251 = pneg %p100
        $region30: #{tpu_custom_call.1} parent=27 // pred_check_branch
          %253 = sbr.rel (%p251) target = $region32
        $region31: #{tpu_custom_call.1} parent=27 // pred_region
          %s254 = smul.u32 3, %s20
          %s256 = ssub.s32 384, 384
          %257 = vsyncadd %s247, %s256
          %s258 = smul.addr %s21, 3
          %s259 = sadd.s32 %s254, %s258
          %s260 = smul.addr %s259, 128
          %s261 = scalar_lea.hbm %s2, %s260
          %s263 = sshll.u32 %s250, 4
          %s264 = int_to_ptr.vmem [resolvable:$true] %s263
          %266 = dma.vmem_to_hbm [thread:$0]  %s264, 384, %s261, %s247
        $region32: #{tpu_custom_call.1} parent=27 // pred_fallthru
          _
      $region28: #{tpu_custom_call.1} parent=5 // pred_fallthru
        _
      %p267 = scmp.le.s32.totalorder 2, %s11
      // Predicated region
      $region33: #{tpu_custom_call.1} parent=5 // pred_check
        %p268 = pneg %p267
      $region34: #{tpu_custom_call.1} parent=5 // pred_check_branch
        %270 = sbr.rel (%p268) target = $region36
      $region35: #{tpu_custom_call.1} parent=5 // pred_region
        %s271 = ssub.s32 %s11, 2
        // Predicated region
        $region37: #{tpu_custom_call.1} parent=35 // pred_check
          %p272 = pneg %p106
        $region38: #{tpu_custom_call.1} parent=35 // pred_check_branch
          %274 = sbr.rel (%p272) target = $region40
        $region39: #{tpu_custom_call.1} parent=35 // pred_region
          %s275 = sand.u32 %s91, 1
          %s276 = scalar_lea.sflag [#allocation3], %s275
          %s277 = sand.u32 %s91, 1
          %s278 = smul.addr %s277, 24
          %s279 = scalar_lea.vmem [#allocation2], %s278
          %280 = dma.done %s276, 384
        $region40: #{tpu_custom_call.1} parent=35 // pred_fallthru
          _
      $region36: #{tpu_custom_call.1} parent=5 // pred_fallthru
        _
    $region6: #{tpu_custom_call.1} parent=1 // loop_footer
      %s15 = sadd.s32 1, %s11
    $region7: #{tpu_custom_call.1} parent=1 // loop_footer_branch
      %10 = sbr.rel target = $region3
    $region8: #{tpu_custom_call.1} parent=1 // loop_exit
      _
    %281 = vsyncpa [#allocation3], 1
    %s282 = scalar_lea.sflag [#allocation3], 1
    %283 = vsyncpa %s282, 1

</llo_original>
